<compile_context>
chip_gen: v7x
topology: tpu7x:2x2x1
jax: 0.10.0
libtpu: 0.0.40
codegen_flags: <defaults>
</compile_context>

<pallas_src>
import jax
import jax.numpy as jnp
from jax.experimental import pallas as pl
from jax.experimental.pallas import tpu as pltpu

_LANE = 128


def _round_up(a: int, m: int) -> int:
    return ((a + m - 1) // m) * m


def linear_sigmoid_kernel(w_ref, b_ref, xt_ref, o_ref):
    # w_ref : (F,)          f32 in SMEM  (3 weights as scalars)
    # b_ref : (1,)          f32 in SMEM  (bias as a scalar)
    # xt_ref: (F, TR, 128)  f32 in VMEM  (features, batch-rows, batch-lanes)
    # o_ref : (TR, 128)     f32 in VMEM  (sublane+lane dense output slab)
    F = xt_ref.shape[0]
    # Unrolled VPU contraction with the bias folded into the first FMA:
    #   y = w0*x0 + b + w1*x1 + w2*x2    (no MXU, no XLU reduce)
    y = xt_ref[0] * w_ref[0] + b_ref[0]
    for f in range(1, F):
        y = y + xt_ref[f] * w_ref[f]
    # Exact sigmoid with a single EUP op: sigmoid(y) = 0.5*tanh(0.5*y) + 0.5
    o_ref[...] = 0.5 * jnp.tanh(0.5 * y) + 0.5


def custom_model_forward(x, w, b, *, max_tile_rows=1024,
                         min_pallas_batch=4096, force_pallas=False):
    """Sigmoid(x @ w + b) with x: (N, 3), w: (3, 1), b: (1,). Returns (N, 1)."""
    N, F = x.shape
    O = w.shape[1]
    assert O == 1, "CustomModel has out_features=1"

    # Small-N fast path: a kernel dispatch + layout pass costs more than the op.
    if (not force_pallas) and N < min_pallas_batch:
        return jax.nn.sigmoid(
            x.astype(jnp.float32) @ w.astype(jnp.float32) + b.astype(jnp.float32)
        )

    # --- tile selection -------------------------------------------------
    rows = pl.cdiv(N, _LANE)                 # batch rows of 128 lanes
    rows8 = max(8, _round_up(rows, 8))       # sublane alignment
    # Give v7x's two TensorCores work once there's enough of it.
    target_steps = 2 if rows8 >= 16 else 1
    tr = min(max_tile_rows, _round_up(pl.cdiv(rows8, target_steps), 8))
    R = _round_up(rows8, tr)                 # total padded rows
    n_pad = R * _LANE

    # --- layout prep: single fused transpose + pad (no zeros+scatter) ----
    # (N, F) -> (F, n_pad) -> (F, R, 128); padded lanes are zeros -> sigmoid(b),
    # sliced off below.
    xf = x.astype(jnp.float32)
    xt = jnp.pad(xf.T, ((0, 0), (0, n_pad - N))).reshape(F, R, _LANE)

    w_flat = w.reshape(F).astype(jnp.float32)   # 3 scalars -> SMEM
    b_flat = b.reshape(O).astype(jnp.float32)   # 1 scalar  -> SMEM

    # Double-buffered footprint per step: 2 * (F+1) * tr * 128 * 4 B.
    tile_bytes = (F + 1) * tr * _LANE * 4
    vmem_limit = min(64 * 1024 * 1024, max(16 * 1024 * 1024, 4 * tile_bytes))

    out = pl.pallas_call(
        linear_sigmoid_kernel,
        out_shape=jax.ShapeDtypeStruct((R, _LANE), jnp.float32),
        grid=(R // tr,),
        in_specs=[
            pl.BlockSpec(memory_space=pltpu.MemorySpace.SMEM),   # w (F,)
            pl.BlockSpec(memory_space=pltpu.MemorySpace.SMEM),   # b (1,)
            pl.BlockSpec((F, tr, _LANE), lambda i: (0, i, 0)),   # x^T row-slab
        ],
        out_specs=pl.BlockSpec((tr, _LANE), lambda i: (i, 0)),
        compiler_params=pltpu.CompilerParams(
            dimension_semantics=("parallel",),
            vmem_limit_bytes=vmem_limit,
        ),
    )(w_flat, b_flat, xt)

    # Back to the PyTorch layout (N, 1), dropping lane/row padding.
    return out.reshape(n_pad)[:N].reshape(N, O)


if __name__ == "__main__":
    key = jax.random.PRNGKey(0)
    kx, kw, kb = jax.random.split(key, 3)

    F, O = 3, 1

    # nn.Linear-style init: U(-1/sqrt(F), 1/sqrt(F))
    bound = 1.0 / jnp.sqrt(jnp.float32(F))
    w = jax.random.uniform(kw, (F, O), jnp.float32, minval=-bound, maxval=bound)
    b = jax.random.uniform(kb, (O,), jnp.float32, minval=-bound, maxval=bound)

    # Exercise: tiny demo batch (module spec), padded single-tile, and a
    # multi-step grid (2 tiles), all forced through the Pallas path.
    for N in (8, 300, 2500):
        kx, sub = jax.random.split(kx)
        x = jax.random.normal(sub, (N, F), jnp.float32)

        out = custom_model_forward(x, w, b, force_pallas=True)
        jax.block_until_ready(out)

        ref = jax.nn.sigmoid(x @ w + b)
        assert out.shape == (N, O)
        assert jnp.allclose(out, ref, atol=1e-5, rtol=1e-5), f"mismatch at N={N}"

    # Also check the small-N fast path (plain JAX) keeps the same semantics.
    x_small = jax.random.normal(kx, (8, F), jnp.float32)
    out_fast = custom_model_forward(x_small, w, b)
    jax.block_until_ready(out_fast)
    assert jnp.allclose(out_fast, jax.nn.sigmoid(x_small @ w + b),
                        atol=1e-6, rtol=1e-6)

    print("KERNEL_OK")
</pallas_src>

<mosaic_0001>
module attributes {stable_mosaic.version = 11 : i64} {
  func.func @linear_sigmoid_kernel(%arg0: i32, %arg1: memref<3xf32, #tpu.memory_space<smem>>, %arg2: memref<1xf32, #tpu.memory_space<smem>>, %arg3: memref<3x8x128xf32, #tpu.memory_space<vmem>>, %arg4: memref<8x128xf32, #tpu.memory_space<vmem>>) attributes {dimension_semantics = [#tpu.dimension_semantics<parallel>], iteration_bounds = array<i64: 1>, scalar_prefetch = 0 : i64, scratch_operands = 0 : i64, tpu.core_type = #tpu.core_type<tc>, window_params = [{transform_indices = @transform_0, window_bounds = array<i64: 3>}, {transform_indices = @transform_1, window_bounds = array<i64: 1>}, {transform_indices = @transform_2, window_bounds = array<i64: 3, 8, 128>}, {transform_indices = @transform_3, window_bounds = array<i64: 8, 128>}]} {
    %c0 = arith.constant 0 : index
    %c0_0 = arith.constant 0 : index
    %c0_1 = arith.constant 0 : index
    %0 = vector.load %arg3[%c0, %c0_0, %c0_1] : memref<3x8x128xf32, #tpu.memory_space<vmem>>, vector<1x8x128xf32>
    %1 = vector.shape_cast %0 : vector<1x8x128xf32> to vector<8x128xf32>
    %c0_2 = arith.constant 0 : index
    %2 = memref.load %arg1[%c0_2] : memref<3xf32, #tpu.memory_space<smem>>
    %3 = vector.broadcast %2 : f32 to vector<8x128xf32>
    %4 = arith.mulf %1, %3 : vector<8x128xf32>
    %c0_3 = arith.constant 0 : index
    %5 = memref.load %arg2[%c0_3] : memref<1xf32, #tpu.memory_space<smem>>
    %6 = vector.broadcast %5 : f32 to vector<8x128xf32>
    %7 = arith.addf %4, %6 : vector<8x128xf32>
    %c1 = arith.constant 1 : index
    %c0_4 = arith.constant 0 : index
    %c0_5 = arith.constant 0 : index
    %8 = vector.load %arg3[%c1, %c0_4, %c0_5] : memref<3x8x128xf32, #tpu.memory_space<vmem>>, vector<1x8x128xf32>
    %9 = vector.shape_cast %8 : vector<1x8x128xf32> to vector<8x128xf32>
    %c1_6 = arith.constant 1 : index
    %10 = memref.load %arg1[%c1_6] : memref<3xf32, #tpu.memory_space<smem>>
    %11 = vector.broadcast %10 : f32 to vector<8x128xf32>
    %12 = arith.mulf %9, %11 : vector<8x128xf32>
    %13 = arith.addf %7, %12 : vector<8x128xf32>
    %c2 = arith.constant 2 : index
    %c0_7 = arith.constant 0 : index
    %c0_8 = arith.constant 0 : index
    %14 = vector.load %arg3[%c2, %c0_7, %c0_8] : memref<3x8x128xf32, #tpu.memory_space<vmem>>, vector<1x8x128xf32>
    %15 = vector.shape_cast %14 : vector<1x8x128xf32> to vector<8x128xf32>
    %c2_9 = arith.constant 2 : index
    %16 = memref.load %arg1[%c2_9] : memref<3xf32, #tpu.memory_space<smem>>
    %17 = vector.broadcast %16 : f32 to vector<8x128xf32>
    %18 = arith.mulf %15, %17 : vector<8x128xf32>
    %19 = arith.addf %13, %18 : vector<8x128xf32>
    %cst = arith.constant 5.000000e-01 : f32
    %20 = vector.broadcast %cst : f32 to vector<8x128xf32>
    %21 = arith.mulf %20, %19 : vector<8x128xf32>
    %22 = math.tanh %21 : vector<8x128xf32>
    %cst_10 = arith.constant 5.000000e-01 : f32
    %23 = vector.broadcast %cst_10 : f32 to vector<8x128xf32>
    %24 = arith.mulf %23, %22 : vector<8x128xf32>
    %cst_11 = arith.constant 5.000000e-01 : f32
    %25 = vector.broadcast %cst_11 : f32 to vector<8x128xf32>
    %26 = arith.addf %24, %25 : vector<8x128xf32>
    %c0_12 = arith.constant 0 : index
    %c0_13 = arith.constant 0 : index
    %27 = vector.load %arg4[%c0_12, %c0_13] : memref<8x128xf32, #tpu.memory_space<vmem>>, vector<8x128xf32>
    tpu.vector_store %arg4[%c0_12, %c0_13], %26 {strides = array<i32>} : memref<8x128xf32, #tpu.memory_space<vmem>>, vector<8x128xf32>,
    return
  }
  func.func @transform_0(%arg0: i32) -> i32 {
    %c0_i32 = arith.constant 0 : i32
    %c0_i32_0 = arith.constant 0 : i32
    return %c0_i32 : i32
  }
  func.func @transform_1(%arg0: i32) -> i32 {
    %c0_i32 = arith.constant 0 : i32
    %c0_i32_0 = arith.constant 0 : i32
    return %c0_i32 : i32
  }
  func.func @transform_2(%arg0: i32) -> (i32, i32, i32) {
    %c0_i32 = arith.constant 0 : i32
    %c0_i32_0 = arith.constant 0 : i32
    %c0_i32_1 = arith.constant 0 : i32
    return %c0_i32, %arg0, %c0_i32_0 : i32, i32, i32
  }
  func.func @transform_3(%arg0: i32) -> (i32, i32) {
    %c0_i32 = arith.constant 0 : i32
    %c0_i32_0 = arith.constant 0 : i32
    return %arg0, %c0_i32 : i32, i32
  }
}

</mosaic_0001>

<llo_original>
// kernel: tpu_custom_call.1
$region0: #{tpu_custom_call.1}
  #allocation0 [shape = 'u32[]', space=smem, size = 0x4, offset = 0x4, fixed_abs, tag = 'smem constant byte address 0x4 - core index']
  #allocation1 [shape = 'u32[144,128]{1,0:T(1,128)}', space=vmem, size = 0x12000, scoped, tag = 'internal scratch']
  #allocation2 [shape = 'f32[1]{0:T(128)S(6)}', space=smem, size = 0x200, scoped, tag = 'scoped memory for tpu_custom_call.1']
  %s0 = inlined_call_operand.vmem [shape: f32[3], index: 0, kind: input, shape index: {}]
  %s1 = inlined_call_operand.<no memory space> [shape: f32[1], index: 1, kind: input, shape index: {}]
  %s2 = inlined_call_operand.hbm [shape: f32[3,8,128], index: 2, kind: input, shape index: {}]
  %s3 = inlined_call_operand.hbm [shape: f32[8,128], index: 3, kind: output, shape index: {}]
  %s4 = sld [smem:[#allocation0]]
  $region30: #{tpu_custom_call.1} parent=0
    _
  %s6 = ssub.s32 1, %s4
  %s7 = scalar_select 0, %s6, %s4
  %8 = sst [smem:[#allocation2]] %s1
  $region1: #{tpu_custom_call.1} parent=0
    #allocation3 [shape = 'u8[512]{0}', space=smem, size = 0x200, scoped, tag = 'input window, operand 0, single buffered']
    #allocation4 [shape = 's32[1]{0}', space=sflag, size = 0x4, scoped, tag = 'scoped memory for tpu_custom_call.1']
    #allocation5 [shape = 's32[1]{0}', space=sflag, size = 0x4, scoped, tag = 'scoped memory for tpu_custom_call.1']
    #allocation6 [shape = 's32[1]{0}', space=sflag, size = 0x4, scoped, tag = 'scoped memory for tpu_custom_call.1']
    #allocation7 [shape = 'u8[12288]{0}', space=vmem, size = 0x3000, scoped, tag = 'input window, operand 2, single buffered']
    #allocation8 [shape = 'u8[4096]{0}', space=vmem, size = 0x1000, scoped, tag = 'output window, operand 0, single buffered']
    %9 = vsyncpa [#allocation6], 0
    %10 = vsyncpa [#allocation4], 0
    %11 = vsyncpa [#allocation5], 0
    // Predicated region
    $region2: #{tpu_custom_call.1} parent=1 // pred_check
      _
    $region3: #{tpu_custom_call.1} parent=1 // pred_check_branch
      %13 = sbr.rel (0) target = $region5
    $region4: #{tpu_custom_call.1} parent=1 // pred_region
      %s15 = ssub.s32 16, 16
      %16 = vsyncadd [#allocation6], %s15
      %s18 = sshll.u32 %s0, 4
      %s19 = int_to_ptr.vmem [resolvable:$true] %s18
      %21 = dma.vmem_to_smem %s19, 16, [#allocation3], [#allocation6]
    $region5: #{tpu_custom_call.1} parent=1 // pred_fallthru
      _
    // Predicated region
    $region6: #{tpu_custom_call.1} parent=1 // pred_check
      _
    $region7: #{tpu_custom_call.1} parent=1 // pred_check_branch
      %23 = sbr.rel (0) target = $region9
    $region8: #{tpu_custom_call.1} parent=1 // pred_region
      _
    $region9: #{tpu_custom_call.1} parent=1 // pred_fallthru
      _
    // Predicated region
    $region10: #{tpu_custom_call.1} parent=1 // pred_check
      _
    $region11: #{tpu_custom_call.1} parent=1 // pred_check_branch
      %25 = sbr.rel (0) target = $region13
    $region12: #{tpu_custom_call.1} parent=1 // pred_region
      %s27 = ssub.s32 384, 384
      %28 = vsyncadd [#allocation4], %s27
      %s29 = sshll.u32 [#allocation7], 4
      %s30 = int_to_ptr.vmem [resolvable:$true] %s29
      %35 = dma.hbm_to_vmem [thread:$0]  %s2, 384, %s30, [#allocation4], 128, 128, 8
    $region13: #{tpu_custom_call.1} parent=1 // pred_fallthru
      _
    // Predicated region
    $region14: #{tpu_custom_call.1} parent=1 // pred_check
      _
    $region15: #{tpu_custom_call.1} parent=1 // pred_check_branch
      %37 = sbr.rel (0) target = $region17
    $region16: #{tpu_custom_call.1} parent=1 // pred_region
      %38 = dma.done [#allocation6], 16
    $region17: #{tpu_custom_call.1} parent=1 // pred_fallthru
      _
    // Predicated region
    $region18: #{tpu_custom_call.1} parent=1 // pred_check
      _
    $region19: #{tpu_custom_call.1} parent=1 // pred_check_branch
      %40 = sbr.rel (0) target = $region21
    $region20: #{tpu_custom_call.1} parent=1 // pred_region
      %41 = dma.done [#allocation4], 384
    $region21: #{tpu_custom_call.1} parent=1 // pred_fallthru
      _
    %42 = sfence
    %v43 = vld [vmem:[#allocation7] sm:$0xff]
    %s44 = sld [smem:[#allocation3]]
    %v45 = vstv %s44
    %v46 = vmul.f32 %v43, %v45
    %s47 = sld [smem:[#allocation2]]
    %v48 = vstv %s47
    %v49 = vadd.f32 %v46, %v48
    %s50 = scalar_lea.vmem [#allocation7], 8
    %v51 = vld [vmem:[%s50] sm:$0xff]
    %s52 = sld [smem:[#allocation3 + $0x1]]
    %v53 = vstv %s52
    %v54 = vmul.f32 %v51, %v53
    %v55 = vadd.f32 %v49, %v54
    %s56 = scalar_lea.vmem [#allocation7], 16
    %v57 = vld [vmem:[%s56] sm:$0xff]
    %s58 = sld [smem:[#allocation3 + $0x2]]
    %v59 = vstv %s58
    %v60 = vmul.f32 %v57, %v59
    %v61 = vadd.f32 %v55, %v60
    %v62 = vmul.f32 %v61, 0.5
    %v63 = vtanh.pop %v62
    %v64 = vmul.f32 %v63, 0.5
    %v65 = vadd.f32 %v64, 0.5
    %66 = vst [vmem:[#allocation8] sm:$0xff] %v65
    // Predicated region
    $region22: #{tpu_custom_call.1} parent=1 // pred_check
      _
    $region23: #{tpu_custom_call.1} parent=1 // pred_check_branch
      %68 = sbr.rel (0) target = $region25
    $region24: #{tpu_custom_call.1} parent=1 // pred_region
      %s70 = ssub.s32 128, 128
      %71 = vsyncadd [#allocation5], %s70
      %s73 = sshll.u32 [#allocation8], 4
      %s74 = int_to_ptr.vmem [resolvable:$true] %s73
      %76 = dma.vmem_to_hbm [thread:$0]  %s74, 128, %s3, [#allocation5]
    $region25: #{tpu_custom_call.1} parent=1 // pred_fallthru
      _
    // Predicated region
    $region26: #{tpu_custom_call.1} parent=1 // pred_check
      _
    $region27: #{tpu_custom_call.1} parent=1 // pred_check_branch
      %78 = sbr.rel (0) target = $region29
    $region28: #{tpu_custom_call.1} parent=1 // pred_region
      %79 = dma.done [#allocation5], 128
    $region29: #{tpu_custom_call.1} parent=1 // pred_fallthru
      _
    %80 = vsyncpa [#allocation4], 1
    %81 = vsyncpa [#allocation5], 1
    %82 = vsyncpa [#allocation6], 1

</llo_original>
